<compile_context>
chip_gen: v7x
topology: tpu7x:2x2x1
jax: 0.10.0
libtpu: 0.0.40
codegen_flags: <defaults>
</compile_context>

<pallas_src>
import jax
import jax.numpy as jnp
from jax.experimental import pallas as pl
from jax.experimental.pallas import tpu as pltpu


_LANE = 1024          # lane-dense last dim: 8 full 128-lane vregs per sublane row
_MAX_TILE_ROWS = 512  # 512 x 1024 x 4 B = 2 MiB per buffer (fits all VMEM budgets)


def _copy_kernel(x_ref, o_ref):
    # Identity "reconstruction": stream the VMEM tile through the VPU.
    # (This is where a concrete subclass's network body would live.)
    o_ref[...] = x_ref[...]


@jax.jit
def reconstructor_forward(x: jnp.ndarray) -> dict:
    """Pallas-backed forward of the (abstract) Reconstructor.

    Args:
      x: NCHW float array, e.g. zero-filled k-space reconstruction input.

    Returns:
      Dict with the pass-through "reconstruction" (matching the Dict[str, Any]
      return annotation of the PyTorch module).
    """
    orig_shape = x.shape
    n = x.size

    # --- layout plumbing: flatten to a lane-dense (rows, 1024) slab ----------
    rows = pl.cdiv(n, _LANE)
    if rows > _MAX_TILE_ROWS:
        tile_rows = _MAX_TILE_ROWS
        # round rows up to a multiple of the tile height so every block is full
        rows = ((rows + tile_rows - 1) // tile_rows) * tile_rows
    else:
        # block covers the full array extent -> (8,128) rule is satisfied
        tile_rows = rows

    padded = rows * _LANE
    flat = x.reshape(-1)
    if padded != n:
        flat = jnp.pad(flat, (0, padded - n))
    flat2d = flat.reshape(rows, _LANE)

    grid = (rows // tile_rows,)

    out2d = pl.pallas_call(
        _copy_kernel,
        out_shape=jax.ShapeDtypeStruct((rows, _LANE), x.dtype),
        grid_spec=pl.GridSpec(
            grid=grid,
            in_specs=[pl.BlockSpec((tile_rows, _LANE), lambda i: (i, 0))],
            out_specs=pl.BlockSpec((tile_rows, _LANE), lambda i: (i, 0)),
        ),
        # Identity path: reuse the (donatable, flattened) input buffer as the
        # output buffer — no second HBM allocation.
        input_output_aliases={0: 0},
        compiler_params=pltpu.CompilerParams(
            dimension_semantics=("parallel",),
            vmem_limit_bytes=32 * 1024 * 1024,
        ),
    )(flat2d)

    recon = out2d.reshape(-1)[:n].reshape(orig_shape)
    return {"reconstruction": recon}


if __name__ == "__main__":
    key = jax.random.PRNGKey(0)
    # Small NCHW input consistent with an MRI reconstructor's image input.
    x = jax.random.normal(key, (2, 4, 16, 16), dtype=jnp.float32)

    result = reconstructor_forward(x)
    recon = jax.block_until_ready(result["reconstruction"])

    # Sanity check: abstract base class semantics == pass-through.
    assert recon.shape == x.shape
    assert recon.dtype == x.dtype
    assert bool(jnp.allclose(recon, x))

    print("KERNEL_OK")
</pallas_src>

<mosaic_0001>
module attributes {stable_mosaic.version = 11 : i64} {
  func.func @_copy_kernel(%arg0: i32, %arg1: memref<2x1024xf32, #tpu.memory_space<vmem>>, %arg2: memref<2x1024xf32, #tpu.memory_space<vmem>>) attributes {dimension_semantics = [#tpu.dimension_semantics<parallel>], iteration_bounds = array<i64: 1>, scalar_prefetch = 0 : i64, scratch_operands = 0 : i64, tpu.core_type = #tpu.core_type<tc>, window_params = [{transform_indices = @transform_0, window_bounds = array<i64: 2, 1024>}, {transform_indices = @transform_1, window_bounds = array<i64: 2, 1024>}]} {
    %c0 = arith.constant 0 : index
    %c0_0 = arith.constant 0 : index
    %0 = vector.load %arg1[%c0, %c0_0] : memref<2x1024xf32, #tpu.memory_space<vmem>>, vector<2x1024xf32>
    %c0_1 = arith.constant 0 : index
    %c0_2 = arith.constant 0 : index
    %1 = vector.load %arg2[%c0_1, %c0_2] : memref<2x1024xf32, #tpu.memory_space<vmem>>, vector<2x1024xf32>
    tpu.vector_store %arg2[%c0_1, %c0_2], %0 {strides = array<i32>} : memref<2x1024xf32, #tpu.memory_space<vmem>>, vector<2x1024xf32>,
    return
  }
  func.func @transform_0(%arg0: i32) -> (i32, i32) {
    %c0_i32 = arith.constant 0 : i32
    %c0_i32_0 = arith.constant 0 : i32
    return %arg0, %c0_i32 : i32, i32
  }
  func.func @transform_1(%arg0: i32) -> (i32, i32) {
    %c0_i32 = arith.constant 0 : i32
    %c0_i32_0 = arith.constant 0 : i32
    return %arg0, %c0_i32 : i32, i32
  }
}

</mosaic_0001>

<llo_original>
// kernel: reconstructor_forward.1
$region0: #{reconstructor_forward.1}
  #allocation0 [shape = 'u32[]', space=smem, size = 0x4, offset = 0x4, fixed_abs, tag = 'smem constant byte address 0x4 - core index']
  #allocation1 [shape = 'u32[144,128]{1,0:T(1,128)}', space=vmem, size = 0x12000, scoped, tag = 'internal scratch']
  %s0 = inlined_call_operand.vmem [shape: f32[2,1024], index: 0, kind: input, shape index: {}, may-alias: {0,1}]
  %s1 = inlined_call_operand.vmem [shape: f32[2,1024], index: 1, kind: output, shape index: {}, may-alias: {0,1}]
  %s2 = sld [smem:[#allocation0]]
  $region14: #{reconstructor_forward.1} parent=0
    _
  %s4 = ssub.s32 1, %s2
  %s5 = scalar_select 0, %s4, %s2
  // Predicated region
  $region2: #{reconstructor_forward.1} parent=0 // pred_check
    _
  $region3: #{reconstructor_forward.1} parent=0 // pred_check_branch
    %7 = sbr.rel (0) target = $region5
  $region4: #{reconstructor_forward.1} parent=0 // pred_region
    _
  $region5: #{reconstructor_forward.1} parent=0 // pred_fallthru
    _
  %v8 = vld [vmem:[%s0] sm:$0xff]
  %v9 = vld [vmem:[%s0 + $0x8] sm:$0xff]
  %10 = vst [vmem:[%s1] sm:$0xff] %v8
  %11 = vst [vmem:[%s1 + $0x8] sm:$0xff] %v9
  // Predicated region
  $region6: #{reconstructor_forward.1} parent=0 // pred_check
    _
  $region7: #{reconstructor_forward.1} parent=0 // pred_check_branch
    %13 = sbr.rel (0) target = $region9
  $region8: #{reconstructor_forward.1} parent=0 // pred_region
    _
  $region9: #{reconstructor_forward.1} parent=0 // pred_fallthru
    _
  // Predicated region
  $region10: #{reconstructor_forward.1} parent=0 // pred_check
    _
  $region11: #{reconstructor_forward.1} parent=0 // pred_check_branch
    %15 = sbr.rel (0) target = $region13
  $region12: #{reconstructor_forward.1} parent=0 // pred_region
    _
  $region13: #{reconstructor_forward.1} parent=0 // pred_fallthru
    _

</llo_original>
